<compile_context>
chip_gen: v6e
topology: v6e:2x2x1
jax: 0.10.0
libtpu: 0.0.40
codegen_flags: <defaults>
</compile_context>

<pallas_src>
import jax
import jax.numpy as jnp
from jax.experimental import pallas as pl
from jax.experimental.pallas import tpu as pltpu


def _conv1x1_kernel(w_ref, b_ref, x_ref, o_ref):
    # w_ref: (C_out, C_in)  VMEM, resident across the grid
    # b_ref: (C_out, 1)     VMEM, resident across the grid
    # x_ref: (1, C_in, T)   VMEM tile of the input
    # o_ref: (1, C_out, T)  VMEM tile of the output
    acc = jnp.dot(w_ref[...], x_ref[0], preferred_element_type=jnp.float32)
    o_ref[0] = (acc + b_ref[...]).astype(o_ref.dtype)


def _round_down_128(v):
    return max(128, (v // 128) * 128)


def conv1x1_pallas(x_nchw, weight, bias, *, lane_tile=4096):
    """x_nchw: (N, C_in, H, W) float32; weight: (C_out, C_in); bias: (C_out,)."""
    N, C_in, H, W = x_nchw.shape
    C_out = weight.shape[0]
    HW = H * W

    # ---- choose the lane tile -------------------------------------------------
    # Multiple of 128; never larger than H*W rounded up to 128 (avoid pointless
    # padding); keep at least ~4 grid steps so v7x's dual TensorCores both work.
    lt = _round_down_128(min(lane_tile, pl.cdiv(HW, 128) * 128))
    while lt > 128 and N * pl.cdiv(HW, lt) < 4:
        lt = _round_down_128(lt // 2)

    HW_pad = pl.cdiv(HW, lt) * lt

    # ---- layout: pure reshape, no transpose (NCHW is contiguous as (N,C,H*W)) --
    x3 = x_nchw.reshape(N, C_in, HW)
    if HW_pad != HW:
        x3 = jnp.pad(x3, ((0, 0), (0, 0), (0, HW_pad - HW)))

    b2d = bias.reshape(C_out, 1)

    grid = (N, HW_pad // lt)

    # Explicit VMEM budget: double-buffered x/out tiles + params + headroom,
    # clamped to [16 MiB, 32 MiB] (safe on v5e/v6e/v7x scoped defaults).
    needed = 2 * 2 * (C_in + C_out) * lt * 4 + (1 << 20)
    vmem_bytes = min(32 * 1024 * 1024, max(16 * 1024 * 1024, needed))

    out3 = pl.pallas_call(
        _conv1x1_kernel,
        out_shape=jax.ShapeDtypeStruct((N, C_out, HW_pad), x_nchw.dtype),
        grid_spec=pltpu.PrefetchScalarGridSpec(
            num_scalar_prefetch=0,
            grid=grid,
            in_specs=[
                pl.BlockSpec((C_out, C_in), lambda n, i: (0, 0)),      # weight (resident)
                pl.BlockSpec((C_out, 1), lambda n, i: (0, 0)),         # bias   (resident)
                pl.BlockSpec((1, C_in, lt), lambda n, i: (n, 0, i)),   # x tile
            ],
            out_specs=pl.BlockSpec((1, C_out, lt), lambda n, i: (n, 0, i)),
        ),
        compiler_params=pltpu.CompilerParams(
            dimension_semantics=("parallel", "parallel"),
            vmem_limit_bytes=vmem_bytes,
        ),
    )(weight, b2d, x3)

    if HW_pad != HW:
        out3 = out3[:, :, :HW]
    return out3.reshape(N, C_out, H, W)


def _reference(x, weight, bias):
    return jnp.einsum("oc,nchw->nohw", weight, x) + bias[None, :, None, None]


if __name__ == "__main__":
    key = jax.random.PRNGKey(0)
    kx, kw, kb, kx2 = jax.random.split(key, 4)

    # Small shapes consistent with Conv2d(5, 5, 1): N=2, C=5, H=W=16
    N, C, H, W = 2, 5, 16, 16
    x = jax.random.normal(kx, (N, C, H, W), dtype=jnp.float32)

    # Deterministic synthetic parameters (PyTorch weight (5,5,1,1) -> (5,5))
    weight = jax.random.normal(kw, (5, 5), dtype=jnp.float32) * 0.1
    bias = jax.random.normal(kb, (5,), dtype=jnp.float32) * 0.1

    out = conv1x1_pallas(x, weight, bias)
    out = jax.block_until_ready(out)
    ref = _reference(x, weight, bias)
    assert out.shape == (N, 5, H, W)
    assert jnp.allclose(out, ref, atol=1e-5, rtol=1e-5)

    # Second check: non-128-divisible spatial extent exercises the padding path.
    H2, W2 = 15, 15
    x2 = jax.random.normal(kx2, (N, C, H2, W2), dtype=jnp.float32)
    out2 = jax.block_until_ready(conv1x1_pallas(x2, weight, bias))
    ref2 = _reference(x2, weight, bias)
    assert out2.shape == (N, 5, H2, W2)
    assert jnp.allclose(out2, ref2, atol=1e-5, rtol=1e-5)

    print("KERNEL_OK")
</pallas_src>

<mosaic_0001>
module attributes {stable_mosaic.version = 11 : i64} {
  func.func @_conv1x1_kernel(%arg0: i32, %arg1: i32, %arg2: memref<5x5xf32, #tpu.memory_space<vmem>>, %arg3: memref<5x1xf32, #tpu.memory_space<vmem>>, %arg4: memref<1x5x128xf32, #tpu.memory_space<vmem>>, %arg5: memref<1x5x128xf32, #tpu.memory_space<vmem>>) attributes {dimension_semantics = [#tpu.dimension_semantics<parallel>, #tpu.dimension_semantics<parallel>], iteration_bounds = array<i64: 2, 2>, scalar_prefetch = 0 : i64, scratch_operands = 0 : i64, tpu.core_type = #tpu.core_type<tc>, window_params = [{pipeline_mode = #tpu.pipeline_mode<synchronous>, transform_indices = @transform_0, window_bounds = array<i64: 5, 5>}, {pipeline_mode = #tpu.pipeline_mode<synchronous>, transform_indices = @transform_1, window_bounds = array<i64: 5, 1>}, {transform_indices = @transform_2, window_bounds = array<i64: 1, 5, 128>}, {transform_indices = @transform_3, window_bounds = array<i64: 1, 5, 128>}]} {
    %c0 = arith.constant 0 : index
    %c0_0 = arith.constant 0 : index
    %0 = vector.load %arg2[%c0, %c0_0] : memref<5x5xf32, #tpu.memory_space<vmem>>, vector<5x5xf32>
    %c0_1 = arith.constant 0 : index
    %c0_2 = arith.constant 0 : index
    %c0_3 = arith.constant 0 : index
    %1 = vector.load %arg4[%c0_1, %c0_2, %c0_3] : memref<1x5x128xf32, #tpu.memory_space<vmem>>, vector<1x5x128xf32>
    %2 = vector.shape_cast %1 : vector<1x5x128xf32> to vector<5x128xf32>
    %cst = arith.constant dense<0.000000e+00> : vector<5x128xf32>
    %3 = tpu.matmul %0, %2, %cst {dimension_numbers = #tpu.dot_dimension_numbers<[1], [0], [0], [1], [0, 0, 1, 1], [], []>} : vector<5x5xf32>, vector<5x128xf32>, vector<5x128xf32> -> vector<5x128xf32>
    %c0_4 = arith.constant 0 : index
    %c0_5 = arith.constant 0 : index
    %4 = vector.load %arg3[%c0_4, %c0_5] : memref<5x1xf32, #tpu.memory_space<vmem>>, vector<5x1xf32>
    %5 = vector.broadcast %4 : vector<5x1xf32> to vector<5x128xf32>
    %6 = arith.addf %3, %5 : vector<5x128xf32>
    %c0_6 = arith.constant 0 : index
    %c0_7 = arith.constant 0 : index
    %c0_8 = arith.constant 0 : index
    %7 = vector.load %arg5[%c0_6, %c0_7, %c0_8] : memref<1x5x128xf32, #tpu.memory_space<vmem>>, vector<1x5x128xf32>
    %8 = vector.shape_cast %7 : vector<1x5x128xf32> to vector<5x128xf32>
    %9 = vector.shape_cast %6 : vector<5x128xf32> to vector<1x5x128xf32>
    tpu.vector_store %arg5[%c0_6, %c0_7, %c0_8], %9 {strides = array<i32>} : memref<1x5x128xf32, #tpu.memory_space<vmem>>, vector<1x5x128xf32>,
    return
  }
  func.func @transform_0(%arg0: i32, %arg1: i32) -> (i32, i32) {
    %c0_i32 = arith.constant 0 : i32
    %c0_i32_0 = arith.constant 0 : i32
    %c0_i32_1 = arith.constant 0 : i32
    return %c0_i32, %c0_i32_0 : i32, i32
  }
  func.func @transform_1(%arg0: i32, %arg1: i32) -> (i32, i32) {
    %c0_i32 = arith.constant 0 : i32
    %c0_i32_0 = arith.constant 0 : i32
    %c0_i32_1 = arith.constant 0 : i32
    return %c0_i32, %c0_i32_0 : i32, i32
  }
  func.func @transform_2(%arg0: i32, %arg1: i32) -> (i32, i32, i32) {
    %c0_i32 = arith.constant 0 : i32
    %c0_i32_0 = arith.constant 0 : i32
    return %arg0, %c0_i32, %arg1 : i32, i32, i32
  }
  func.func @transform_3(%arg0: i32, %arg1: i32) -> (i32, i32, i32) {
    %c0_i32 = arith.constant 0 : i32
    %c0_i32_0 = arith.constant 0 : i32
    return %arg0, %c0_i32, %arg1 : i32, i32, i32
  }
}

</mosaic_0001>

<llo_original>
// kernel: tpu_custom_call.1
$region0: #{tpu_custom_call.1}
  #allocation0 [shape = 'u32[]', space=smem, size = 0x4, offset = 0x4, fixed_abs, tag = 'smem constant byte address 0x4 - core index']
  #allocation1 [shape = 'u32[144,128]{1,0:T(1,128)}', space=vmem, size = 0x12000, scoped, tag = 'internal scratch']
  %s0 = inlined_call_operand.vmem [shape: f32[5,5], index: 0, kind: input, shape index: {}]
  %s1 = inlined_call_operand.vmem [shape: f32[5,1], index: 1, kind: input, shape index: {}]
  %s2 = inlined_call_operand.vmem [shape: f32[2,5,256], index: 2, kind: input, shape index: {}]
  %s3 = inlined_call_operand.vmem [shape: f32[2,5,256], index: 3, kind: output, shape index: {}]
  %s4 = sld [smem:[#allocation0]]
  $region45: #{tpu_custom_call.1} parent=0
    _
  %s6 = ssub.s32 1, %s4
  %s7 = scalar_select 0, %s6, %s4
  loop: start=0, step=1, limit=6
  $region2: #{tpu_custom_call.1} parent=0 // loop_pre_header
    _
  $region3: #{tpu_custom_call.1} parent=0 // loop_header
    %s9 = sphi 0, %s13
    %p10 = scmp.ge.s32.totalorder %s9, 6
    %s16 = sphi 0, %s28
    %s17 = sphi 0, %s24
    %s18 = sphi 0, %s16
    %s19 = sphi 0, %s17
    %s20 = sphi 0, %s18
    %s21 = sphi 0, %s19
    %s29 = sphi 0, %s29
    %s31 = sphi 0, %s29
    %s32 = sphi 0, %s31
    %s46 = sphi 0, %s32
    %s50 = sphi 0, %s50
    %s52 = sphi 0, %s50
    %s53 = sphi 0, %s52
    %s67 = sphi 0, %s53
    %s75 = sphi 0, %s77
    %s78 = sphi 0, %s75
    %s79 = sphi 0, %s78
    %s95 = sphi 0, %s79
    %s103 = sphi 0, %s105
    %s106 = sphi 0, %s103
    %s107 = sphi 0, %s106
    %s123 = sphi 0, %s107
  $region4: #{tpu_custom_call.1} parent=0 // loop_header_branch
    %12 = sbr.rel (%p10) target = $region8
  $region5: #{tpu_custom_call.1} parent=0 // loop_body
    %s14 = ssub.s32 %s9, 1
    %s15 = ssub.s32 %s9, 2
    %s22 = sadd.s32 1, %s17
    %p23 = scmp.ge.s32.totalorder %s22, 2
    %s24 = scalar_select %p23, 0, %s22
    %s25 = sadd.s32 1, %s16
    %s26 = scalar_select %p23, %s25, %s16
    %p27 = scmp.ge.s32.totalorder %s26, 2
    %s28 = scalar_select %p27, 0, %s26
    %s30 = sadd.s32 %s29, 1
    %p33 = scmp.eq.s32.totalorder %s9, 3
    %p34 = scmp.ne.s32.totalorder %s29, %s31
    %p35 = scmp.eq.s32.totalorder %s9, 0
    %p36 = por %p34, %p35
    %p37 = scmp.ne.s32.totalorder %s29, %s31
    %p38 = scmp.eq.s32.totalorder %s14, 3
    %p39 = por %p37, %p38
    %p40 = scmp.ne.s32.totalorder %s31, %s32
    %p41 = scmp.eq.s32.totalorder %s14, 0
    %p42 = por %p40, %p41
    %p43 = scmp.ne.s32.totalorder %s31, %s32
    %p44 = scmp.eq.s32.totalorder %s15, 3
    %p45 = por %p43, %p44
    %p47 = scmp.ne.s32.totalorder %s32, %s46
    %p48 = scmp.eq.s32.totalorder %s15, 0
    %p49 = por %p47, %p48
    %s51 = sadd.s32 %s50, 1
    %p54 = scmp.eq.s32.totalorder %s9, 3
    %p55 = scmp.ne.s32.totalorder %s50, %s52
    %p56 = scmp.eq.s32.totalorder %s9, 0
    %p57 = por %p55, %p56
    %p58 = scmp.ne.s32.totalorder %s50, %s52
    %p59 = scmp.eq.s32.totalorder %s14, 3
    %p60 = por %p58, %p59
    %p61 = scmp.ne.s32.totalorder %s52, %s53
    %p62 = scmp.eq.s32.totalorder %s14, 0
    %p63 = por %p61, %p62
    %p64 = scmp.ne.s32.totalorder %s52, %s53
    %p65 = scmp.eq.s32.totalorder %s15, 3
    %p66 = por %p64, %p65
    %p68 = scmp.ne.s32.totalorder %s53, %s67
    %p69 = scmp.eq.s32.totalorder %s15, 0
    %p70 = por %p68, %p69
    %s71 = ssub.s32 %s16, %s28
    %s72 = ssub.s32 %s17, %s24
    %s73 = sor.u32 %s71, %s72
    %p74 = scmp.eq.s32.totalorder %s73, 0
    %s76 = sadd.s32 %s75, 1
    %s77 = scalar_select %p74, %s75, %s76
    %p80 = pneg %p74
    %p81 = scmp.eq.s32.totalorder %s9, 3
    %p82 = por %p80, %p81
    %p83 = scmp.ne.s32.totalorder %s75, %s78
    %p84 = scmp.eq.s32.totalorder %s9, 0
    %p85 = por %p83, %p84
    %p86 = scmp.ne.s32.totalorder %s75, %s78
    %p87 = scmp.eq.s32.totalorder %s14, 3
    %p88 = por %p86, %p87
    %p89 = scmp.ne.s32.totalorder %s78, %s79
    %p90 = scmp.eq.s32.totalorder %s14, 0
    %p91 = por %p89, %p90
    %p92 = scmp.ne.s32.totalorder %s78, %s79
    %p93 = scmp.eq.s32.totalorder %s15, 3
    %p94 = por %p92, %p93
    %p96 = scmp.ne.s32.totalorder %s79, %s95
    %p97 = scmp.eq.s32.totalorder %s15, 0
    %p98 = por %p96, %p97
    %s99 = ssub.s32 %s16, %s28
    %s100 = ssub.s32 %s17, %s24
    %s101 = sor.u32 %s99, %s100
    %p102 = scmp.eq.s32.totalorder %s101, 0
    %s104 = sadd.s32 %s103, 1
    %s105 = scalar_select %p102, %s103, %s104
    %p108 = pneg %p102
    %p109 = scmp.eq.s32.totalorder %s9, 3
    %p110 = por %p108, %p109
    %p111 = scmp.ne.s32.totalorder %s103, %s106
    %p112 = scmp.eq.s32.totalorder %s9, 0
    %p113 = por %p111, %p112
    %p114 = scmp.ne.s32.totalorder %s103, %s106
    %p115 = scmp.eq.s32.totalorder %s14, 3
    %p116 = por %p114, %p115
    %p117 = scmp.ne.s32.totalorder %s106, %s107
    %p118 = scmp.eq.s32.totalorder %s14, 0
    %p119 = por %p117, %p118
    %p120 = scmp.ne.s32.totalorder %s106, %s107
    %p121 = scmp.eq.s32.totalorder %s15, 3
    %p122 = por %p120, %p121
    %p124 = scmp.ne.s32.totalorder %s107, %s123
    %p125 = scmp.eq.s32.totalorder %s15, 0
    %p126 = por %p124, %p125
    %p127 = scmp.le.s32.totalorder 1, %s9
    %p128 = scmp.lt.s32.totalorder %s9, 5
    %p129 = pnand %p127, %p128
    %p130 = pneg %p129
    // Predicated region
    $region9: #{tpu_custom_call.1} parent=5 // pred_check
      _
    $region10: #{tpu_custom_call.1} parent=5 // pred_check_branch
      %132 = sbr.rel (%p129) target = $region12
    $region11: #{tpu_custom_call.1} parent=5 // pred_region
      %s133 = ssub.s32 %s9, 1
      // Predicated region
      $region13: #{tpu_custom_call.1} parent=11 // pred_check
        %p134 = pneg %p42
      $region14: #{tpu_custom_call.1} parent=11 // pred_check_branch
        %136 = sbr.rel (%p134) target = $region16
      $region15: #{tpu_custom_call.1} parent=11 // pred_region
        _
      $region16: #{tpu_custom_call.1} parent=11 // pred_fallthru
        _
      // Predicated region
      $region17: #{tpu_custom_call.1} parent=11 // pred_check
        %p137 = pneg %p63
      $region18: #{tpu_custom_call.1} parent=11 // pred_check_branch
        %139 = sbr.rel (%p137) target = $region20
      $region19: #{tpu_custom_call.1} parent=11 // pred_region
        _
      $region20: #{tpu_custom_call.1} parent=11 // pred_fallthru
        _
    $region12: #{tpu_custom_call.1} parent=5 // pred_fallthru
      _
    %p140 = scmp.lt.s32.totalorder %s9, 4
    // Predicated region
    $region21: #{tpu_custom_call.1} parent=5 // pred_check
      %p141 = pneg %p140
    $region22: #{tpu_custom_call.1} parent=5 // pred_check_branch
      %143 = sbr.rel (%p141) target = $region24
    $region23: #{tpu_custom_call.1} parent=5 // pred_region
      // Predicated region
      $region25: #{tpu_custom_call.1} parent=23 // pred_check
        %p144 = pneg %p85
      $region26: #{tpu_custom_call.1} parent=23 // pred_check_branch
        %146 = sbr.rel (%p144) target = $region28
      $region27: #{tpu_custom_call.1} parent=23 // pred_region
        %p147 = scmp.lt.s32.totalorder %s16, 1
        %s148 = scalar_select %p147, %s16, 1
        %p149 = scmp.lt.s32.totalorder %s17, 1
        %s150 = scalar_select %p149, %s17, 1
        %s151 = smul.addr %s148, 2
        %s152 = sadd.s32 %s150, %s151
        %s153 = smul.addr %s152, 8
        %s154 = scalar_lea.vmem %s2, %s153
      $region28: #{tpu_custom_call.1} parent=23 // pred_fallthru
        _
    $region24: #{tpu_custom_call.1} parent=5 // pred_fallthru
      _
    %p155 = scmp.le.s32.totalorder 1, %s9
    %p156 = scmp.lt.s32.totalorder %s9, 5
    %p157 = pnand %p155, %p156
    %p158 = pneg %p157
    // Predicated region
    $region29: #{tpu_custom_call.1} parent=5 // pred_check
      _
    $region30: #{tpu_custom_call.1} parent=5 // pred_check_branch
      %160 = sbr.rel (%p157) target = $region32
    $region31: #{tpu_custom_call.1} parent=5 // pred_region
      %s161 = ssub.s32 %s9, 1
      %p162 = pneg %p42
      %p163 = pneg %p39
      %p164 = pneg %p63
      %p165 = pneg %p60
      %p166 = scmp.lt.s32.totalorder %s18, 1
      %s167 = scalar_select %p166, %s18, 1
      %p168 = scmp.lt.s32.totalorder %s19, 1
      %s169 = scalar_select %p168, %s19, 1
      %s170 = smul.addr %s167, 2
      %s171 = sadd.s32 %s169, %s170
      %s172 = smul.addr %s171, 8
      %s173 = scalar_lea.vmem %s2, %s172
      %p174 = pneg %p91
      %p175 = pneg %p88
      %p176 = pneg %p119
      %p177 = pneg %p116
      %p178 = scmp.lt.s32.totalorder %s18, 1
      %s179 = scalar_select %p178, %s18, 1
      %p180 = scmp.lt.s32.totalorder %s19, 1
      %s181 = scalar_select %p180, %s19, 1
      %s182 = smul.addr %s179, 2
      %s183 = sadd.s32 %s181, %s182
      %s184 = smul.addr %s183, 8
      %s185 = scalar_lea.vmem %s3, %s184
      %p186 = scmp.lt.s32.totalorder %s18, 1
      %s187 = scalar_select %p186, %s18, 1
      %p188 = scmp.lt.s32.totalorder %s19, 1
      %s189 = scalar_select %p188, %s19, 1
      %s190 = smul.addr %s187, 2
      %s191 = sadd.s32 %s189, %s190
      %s192 = smul.addr %s191, 8
      %s193 = scalar_lea.vmem %s2, %s192
      %p194 = scmp.lt.s32.totalorder %s18, 1
      %s195 = scalar_select %p194, %s18, 1
      %p196 = scmp.lt.s32.totalorder %s19, 1
      %s197 = scalar_select %p196, %s19, 1
      %s198 = smul.addr %s195, 2
      %s199 = sadd.s32 %s197, %s198
      %s200 = smul.addr %s199, 8
      %s201 = scalar_lea.vmem %s3, %s200
      %v202 = vld [vmem:[%s0] sm:$0x1f]
      %v203 = vld [vmem:[%s193] sm:$0x1f]
      %v204 = vld [vmem:[%s1] sm:$0x1f]
      %206 = vset.pattern.permute.xlu0 0
      %207 = vperm.xlu0 %206, %v204
      %v208 = vpop.permute.xlu0 %207
      %vm210 = vcmask 39936
      %v212 = vsel %vm210, %v202, 0
      %vm214 = vcmask 1044480
      %v216 = vsel %vm214, %v203, 0
      %218 = vmatprep.subr.mxu0 0.0
      %219 = vmatpush1.msra.mxu0 0.0
      %220 = vmatprep.subr.mxu0 0.0
      %221 = vmatpush1.msra.mxu0 0.0
      %222 = vmatprep.subr.mxu0 0.0
      %223 = vmatpush1.msra.mxu0 0.0
      %224 = vmatprep.subr.mxu0 0.0
      %225 = vmatpush1.msra.mxu0 0.0
      %226 = vmatprep.subr.mxu0 0.0
      %227 = vmatpush1.msra.mxu0 0.0
      %228 = vmatprep.subr.mxu0 0.0
      %229 = vmatpush1.msra.mxu0 0.0
      %230 = vmatprep.subr.mxu0 0.0
      %231 = vmatpush1.msra.mxu0 0.0
      %232 = vmatprep.subr.mxu0 0.0
      %233 = vmatpush1.msra.mxu0 0.0
      %234 = vmatprep.subr.mxu0 0.0
      %235 = vmatpush1.msra.mxu0 0.0
      %236 = vmatprep.subr.mxu0 0.0
      %237 = vmatpush1.msra.mxu0 0.0
      %238 = vmatprep.subr.mxu0 0.0
      %239 = vmatpush1.msra.mxu0 0.0
      %240 = vmatprep.subr.mxu0 0.0
      %241 = vmatpush1.msra.mxu0 0.0
      %242 = vmatprep.subr.mxu0 0.0
      %243 = vmatpush1.msra.mxu0 0.0
      %244 = vmatprep.subr.mxu0 0.0
      %245 = vmatpush1.msra.mxu0 0.0
      %246 = vmatprep.subr.mxu0 0.0
      %247 = vmatpush1.msra.mxu0 0.0
      %248 = vmatprep.subr.mxu0 0.0
      %249 = vmatpush1.msra.mxu0 %v216
      %250 = vmatprep.subr.mxu0 0.0
      %251 = vmatpush2.msra.mxu0 0.0
      %252 = vmatprep.subr.mxu0 0.0
      %253 = vmatpush2.msra.mxu0 0.0
      %254 = vmatprep.subr.mxu0 0.0
      %255 = vmatpush2.msra.mxu0 0.0
      %256 = vmatprep.subr.mxu0 0.0
      %257 = vmatpush2.msra.mxu0 0.0
      %258 = vmatprep.subr.mxu0 0.0
      %259 = vmatpush2.msra.mxu0 0.0
      %260 = vmatprep.subr.mxu0 0.0
      %261 = vmatpush2.msra.mxu0 0.0
      %262 = vmatprep.subr.mxu0 0.0
      %263 = vmatpush2.msra.mxu0 0.0
      %264 = vmatprep.subr.mxu0 0.0
      %265 = vmatpush2.msra.mxu0 0.0
      %266 = vmatprep.subr.mxu0 0.0
      %267 = vmatpush2.msra.mxu0 0.0
      %268 = vmatprep.subr.mxu0 0.0
      %269 = vmatpush2.msra.mxu0 0.0
      %270 = vmatprep.subr.mxu0 0.0
      %271 = vmatpush2.msra.mxu0 0.0
      %272 = vmatprep.subr.mxu0 0.0
      %273 = vmatpush2.msra.mxu0 0.0
      %274 = vmatprep.subr.mxu0 0.0
      %275 = vmatpush2.msra.mxu0 0.0
      %276 = vmatprep.subr.mxu0 0.0
      %277 = vmatpush2.msra.mxu0 0.0
      %278 = vmatprep.subr.mxu0 0.0
      %279 = vmatpush2.msra.mxu0 0.0
      %280 = vmatprep.subr.mxu0 0.0
      %281 = vmatpush2.msra.mxu0 0.0
      %282 = vmatprep.mubr.f32.mxu0 0.0
      %283 = vmatmul.mubr.f32.gmra.mxu0 %v212
      %v284 = vpop.f32.mrf.mxu0
      %v285 = vadd.f32 %v208, %v284
      %v286 = vpop.f32.mrf.mxu0
      %287 = vdwg.mxu0
      %288 = vst [vmem:[%s201] sm:$0x1f] %v285
      %p289 = scmp.lt.s32.totalorder %s18, 1
      %s290 = scalar_select %p289, %s18, 1
      %p291 = scmp.lt.s32.totalorder %s19, 1
      %s292 = scalar_select %p291, %s19, 1
      %s293 = smul.addr %s290, 2
      %s294 = sadd.s32 %s292, %s293
      %s295 = smul.addr %s294, 8
      %s296 = scalar_lea.vmem %s3, %s295
      // Predicated region
      $region33: #{tpu_custom_call.1} parent=31 // pred_check
        %p297 = pneg %p116
      $region34: #{tpu_custom_call.1} parent=31 // pred_check_branch
        %299 = sbr.rel (%p297) target = $region36
      $region35: #{tpu_custom_call.1} parent=31 // pred_region
        _
      $region36: #{tpu_custom_call.1} parent=31 // pred_fallthru
        _
    $region32: #{tpu_custom_call.1} parent=5 // pred_fallthru
      _
    %p300 = scmp.le.s32.totalorder 2, %s9
    // Predicated region
    $region37: #{tpu_custom_call.1} parent=5 // pred_check
      %p301 = pneg %p300
    $region38: #{tpu_custom_call.1} parent=5 // pred_check_branch
      %303 = sbr.rel (%p301) target = $region40
    $region39: #{tpu_custom_call.1} parent=5 // pred_region
      %s304 = ssub.s32 %s9, 2
      // Predicated region
      $region41: #{tpu_custom_call.1} parent=39 // pred_check
        %p305 = pneg %p122
      $region42: #{tpu_custom_call.1} parent=39 // pred_check_branch
        %307 = sbr.rel (%p305) target = $region44
      $region43: #{tpu_custom_call.1} parent=39 // pred_region
        %p308 = scmp.lt.s32.totalorder %s20, 1
        %s309 = scalar_select %p308, %s20, 1
        %p310 = scmp.lt.s32.totalorder %s21, 1
        %s311 = scalar_select %p310, %s21, 1
        %s312 = smul.addr %s309, 2
        %s313 = sadd.s32 %s311, %s312
        %s314 = smul.addr %s313, 8
        %s315 = scalar_lea.vmem %s3, %s314
      $region44: #{tpu_custom_call.1} parent=39 // pred_fallthru
        _
    $region40: #{tpu_custom_call.1} parent=5 // pred_fallthru
      _
  $region6: #{tpu_custom_call.1} parent=0 // loop_footer
    %s13 = sadd.s32 1, %s9
  $region7: #{tpu_custom_call.1} parent=0 // loop_footer_branch
    %8 = sbr.rel target = $region3
  $region8: #{tpu_custom_call.1} parent=0 // loop_exit
    _

</llo_original>
